<compile_context>
chip_gen: v5e
topology: v5e:2x2
jax: 0.10.0
libtpu: 0.0.40
codegen_flags: <defaults>
</compile_context>

<pallas_src>
import jax
import jax.numpy as jnp
from jax.experimental import pallas as pl
from jax.experimental.pallas import tpu as pltpu

_TARGET_TILE_BYTES = 6 * 1024 * 1024   # per output buffer (4-8 MiB sweet spot)
_LANE = 128
_SUBLANE = 8


def _broadcast_kernel(cond_ref, o_ref):
    # cond_ref: (R, 1) precomputed per-row cond values; o_ref: (R, C) slab.
    o_ref[...] = jnp.broadcast_to(cond_ref[...], o_ref.shape)


def _choose_tiles(rows: int, cols: int):
    """Pick (r_block, c_block) for the flattened (rows, cols) f32 output."""
    row_bytes = cols * 4

    # Very large sz: even 8 rows exceed the target tile -> tile columns too.
    # c_block is a multiple of 128 so stores stay unmasked / lane-dense.
    if _SUBLANE * row_bytes > _TARGET_TILE_BYTES:
        c_block = max(_LANE,
                      (_TARGET_TILE_BYTES // (_SUBLANE * 4)) // _LANE * _LANE)
        c_block = min(c_block, cols)
        r_block = _SUBLANE if rows >= _SUBLANE else rows
        return r_block, c_block

    c_block = cols
    r_block = max(_SUBLANE,
                  (_TARGET_TILE_BYTES // row_bytes) // _SUBLANE * _SUBLANE)

    if r_block >= rows:
        if rows >= 2 * _SUBLANE:
            # Guarantee >= 2 grid steps so the "parallel" axis can shard
            # across both v7x TensorCores (a 1-step grid idles one TC).
            r_block = max(_SUBLANE, (rows // 2) // _SUBLANE * _SUBLANE)
        else:
            r_block = rows                      # single full-extent block
    else:
        # Prefer a block that divides rows evenly: a partial trailing block
        # would fall back to masked stores.
        for cand in range(r_block, max(_SUBLANE, r_block // 2) - 1, -_SUBLANE):
            if rows % cand == 0:
                r_block = cand
                break
    return r_block, c_block


def _vmem_budget_bytes(r_block: int, c_block: int, n_out_bufs: int) -> int:
    out_buf = r_block * c_block * 4
    # The (r_block, 1) f32 cond block is lane-padded to 128 columns:
    # ceil(r_block/8) vreg tiles of 4 KiB each (~512 B of VMEM per row).
    in_buf = (-(-r_block // _SUBLANE)) * _SUBLANE * _LANE * 4
    return 2 * in_buf + n_out_bufs * out_buf


def cond_broadcast(inputs: jax.Array, size: int) -> jax.Array:
    b, c = inputs.shape
    # PyTorch module implicitly assumes c >= 2 (-1/(c-1) divides by zero else).
    assert c >= 2, "CondBroadcast_ requires c >= 2"
    fill = -1.0 / (c - 1)

    rows = b * c
    cols = size * size

    # Precompute cond on the tiny (b, c) array (a separate, near-free XLA op);
    # the kernel body is then pure broadcast + store.
    cond = jnp.where(inputs != 0, jnp.float32(1.0), jnp.float32(fill))
    cond = cond.astype(jnp.float32).reshape(rows, 1)

    r_block, c_block = _choose_tiles(rows, cols)
    nr = pl.cdiv(rows, r_block)
    nc = pl.cdiv(cols, c_block)
    total_steps = nr * nc

    # Deeper output buffering only pays off when the grid is long enough; it
    # keeps writebacks queued back-to-back on v7x (3.2 TB/s per TC).
    use_buffered3 = total_steps >= 4 and hasattr(pl, "Buffered")
    n_out_bufs = 3 if use_buffered3 else 2

    # Explicit scoped-VMEM limit sized from the REAL buffer footprints
    # (including the 128x lane padding of the (R, 1) input block); clears the
    # v5e 16 MiB default and stays well under v7x's 64 MiB physical per TC.
    vmem_needed = _vmem_budget_bytes(r_block, c_block, n_out_bufs)
    vmem_limit = int(min(48 * 1024 * 1024,
                         max(16 * 1024 * 1024, int(vmem_needed * 1.5))))

    out_index_map = lambda i, j: (i, j)
    if use_buffered3:
        out_spec = pl.BlockSpec((r_block, c_block), out_index_map,
                                pipeline_mode=pl.Buffered(3))
    else:
        out_spec = pl.BlockSpec((r_block, c_block), out_index_map)

    out_flat = pl.pallas_call(
        _broadcast_kernel,
        out_shape=jax.ShapeDtypeStruct((rows, cols), jnp.float32),
        grid_spec=pl.GridSpec(
            grid=(nr, nc),
            in_specs=[
                pl.BlockSpec((r_block, 1), lambda i, j: (i, 0)),
            ],
            out_specs=out_spec,
        ),
        compiler_params=pltpu.CompilerParams(
            dimension_semantics=("parallel", "parallel"),
            vmem_limit_bytes=vmem_limit,
        ),
        # Tell XLA this is a large memory-bound call so it schedules
        # neighboring HLO work for overlap.
        cost_estimate=pl.CostEstimate(
            flops=0,
            transcendentals=0,
            bytes_accessed=rows * cols * 4 + rows * 4,
        ),
    )(cond)

    # Free, contiguous reshape back to NCHW.
    return out_flat.reshape(b, c, size, size)


def cond_broadcast_ref(inputs: jax.Array, size: int) -> jax.Array:
    b, c = inputs.shape
    mask = inputs != 0
    cond = jnp.where(mask, 1.0, -1.0 / (c - 1)).astype(jnp.float32)
    return jnp.broadcast_to(cond[:, :, None, None], (b, c, size, size))


if __name__ == "__main__":
    key = jax.random.PRNGKey(0)
    b, c, sz = 2, 4, 16
    # Mix of zeros / non-zeros so both mask branches are exercised.
    x = jax.random.bernoulli(key, 0.5, (b, c)).astype(jnp.float32) * 3.0

    out = cond_broadcast(x, sz)
    out = jax.block_until_ready(out)

    ref = cond_broadcast_ref(x, sz)
    assert out.shape == (b, c, sz, sz)
    assert out.dtype == jnp.float32
    assert jnp.allclose(out, ref, atol=1e-6), "mismatch vs reference"

    print("KERNEL_OK")
</pallas_src>

<mosaic_0001>
module attributes {stable_mosaic.version = 11 : i64} {
  func.func @_broadcast_kernel(%arg0: i32, %arg1: i32, %arg2: memref<8x1xf32, #tpu.memory_space<vmem>>, %arg3: memref<8x256xf32, #tpu.memory_space<vmem>>) attributes {dimension_semantics = [#tpu.dimension_semantics<parallel>, #tpu.dimension_semantics<parallel>], iteration_bounds = array<i64: 1, 1>, scalar_prefetch = 0 : i64, scratch_operands = 0 : i64, tpu.core_type = #tpu.core_type<tc>, window_params = [{transform_indices = @transform_0, window_bounds = array<i64: 8, 1>}, {transform_indices = @transform_1, window_bounds = array<i64: 8, 256>}]} {
    %c0 = arith.constant 0 : index
    %c0_0 = arith.constant 0 : index
    %0 = vector.load %arg2[%c0, %c0_0] : memref<8x1xf32, #tpu.memory_space<vmem>>, vector<8x1xf32>
    %1 = vector.shape_cast %0 : vector<8x1xf32> to vector<8x1xf32>
    %2 = vector.broadcast %1 : vector<8x1xf32> to vector<8x256xf32>
    %c0_1 = arith.constant 0 : index
    %c0_2 = arith.constant 0 : index
    %3 = vector.load %arg3[%c0_1, %c0_2] : memref<8x256xf32, #tpu.memory_space<vmem>>, vector<8x256xf32>
    tpu.vector_store %arg3[%c0_1, %c0_2], %2 {strides = array<i32>} : memref<8x256xf32, #tpu.memory_space<vmem>>, vector<8x256xf32>,
    return
  }
  func.func @transform_0(%arg0: i32, %arg1: i32) -> (i32, i32) {
    %c0_i32 = arith.constant 0 : i32
    %c0_i32_0 = arith.constant 0 : i32
    return %arg0, %c0_i32 : i32, i32
  }
  func.func @transform_1(%arg0: i32, %arg1: i32) -> (i32, i32) {
    %c0_i32 = arith.constant 0 : i32
    return %arg0, %arg1 : i32, i32
  }
}

</mosaic_0001>

<llo_original>
// kernel: tpu_custom_call.1
$region0: #{tpu_custom_call.1}
  #allocation0 [shape = 'u32[]', space=smem, size = 0x4, offset = 0x4, fixed_abs, tag = 'smem constant byte address 0x4 - core index']
  #allocation1 [shape = 'u32[72,128]{1,0:T(1,128)}', space=vmem, size = 0x9000, scoped, tag = 'internal scratch']
  %s0 = inlined_call_operand.vmem [shape: f32[8,1], index: 0, kind: input, shape index: {}]
  %s1 = inlined_call_operand.hbm [shape: f32[8,256], index: 1, kind: output, shape index: {}]
  %s2 = sld [smem:[#allocation0]]
  $region14: #{tpu_custom_call.1} parent=0
    _
  %s4 = ssub.s32 1, %s2
  %s5 = scalar_select 0, %s4, %s2
  $region1: #{tpu_custom_call.1} parent=0
    #allocation2 [shape = 'u8[8192]{0}', space=vmem, size = 0x2000, scoped, tag = 'output window, operand 0, single buffered']
    #allocation3 [shape = 's32[1]{0}', space=sflag, size = 0x4, scoped, tag = 'scoped memory for tpu_custom_call.1']
    %6 = vsyncpa [#allocation3], 0
    // Predicated region
    $region2: #{tpu_custom_call.1} parent=1 // pred_check
      _
    $region3: #{tpu_custom_call.1} parent=1 // pred_check_branch
      %8 = sbr.rel (0) target = $region5
    $region4: #{tpu_custom_call.1} parent=1 // pred_region
      _
    $region5: #{tpu_custom_call.1} parent=1 // pred_fallthru
      _
    %v9 = vld [vmem:[%s0] sm:$0xff]
    %11 = vset.pattern.permute.xlu0 0
    %12 = vperm.xlu0 %11, %v9
    %v13 = vpop.permute.xlu0 %12
    %15 = vst [vmem:[#allocation2] sm:$0xff] %v13
    %16 = vst [vmem:[#allocation2 + $0x8] sm:$0xff] %v13
    // Predicated region
    $region6: #{tpu_custom_call.1} parent=1 // pred_check
      _
    $region7: #{tpu_custom_call.1} parent=1 // pred_check_branch
      %18 = sbr.rel (0) target = $region9
    $region8: #{tpu_custom_call.1} parent=1 // pred_region
      %20 = vsyncadd [#allocation3], 0
      %s22 = sshll.u32 [#allocation2], 4
      %s23 = int_to_ptr.vmem [resolvable:$true] %s22
      %s24 = sshll.u32 %s1, 4
      %s25 = int_to_ptr.hbm [resolvable:$true] %s24
      %27 = dma.vmem_to_hbm [thread:$0]  %s23, 256, %s25, [#allocation3]
    $region9: #{tpu_custom_call.1} parent=1 // pred_fallthru
      _
    // Predicated region
    $region10: #{tpu_custom_call.1} parent=1 // pred_check
      _
    $region11: #{tpu_custom_call.1} parent=1 // pred_check_branch
      %29 = sbr.rel (0) target = $region13
    $region12: #{tpu_custom_call.1} parent=1 // pred_region
      %31 = dma.done [#allocation3], 256
    $region13: #{tpu_custom_call.1} parent=1 // pred_fallthru
      _
    %32 = vsyncpa [#allocation3], 1

</llo_original>
